<compile_context>
chip_gen: v7x
topology: tpu7x:2x2x1
jax: 0.10.0
libtpu: 0.0.40
codegen_flags: <defaults>
</compile_context>

<pallas_src>
import jax
import jax.numpy as jnp
from jax.experimental import pallas as pl
from jax.experimental.pallas import tpu as pltpu


def mlp_kernel(x_ref, w12t_ref, b12c_ref, w3t_ref, b3c_ref, w4t_ref, b4_ref, o_ref):
    x = x_ref[...]  # (tb, 13) f32, row-major as supplied

    # Fused layers 1+2, produced feature-major: h[f, t] = sum_k W12[k, f] * x[t, k].
    # NT contraction (contract last dims of both operands) so x never needs an
    # explicit wrapper/kernel transpose.
    h = jax.lax.dot_general(
        w12t_ref[...], x,
        dimension_numbers=(((1,), (1,)), ((), ())),
        preferred_element_type=jnp.float32,
    )                                                    # (10, tb)
    h = jnp.maximum(h + b12c_ref[...], 0.0)              # bias (10,1) broadcasts on lanes; ReLU

    # Layer 3 + Sigmoid (EUP logistic), still feature-major.
    h = jnp.dot(w3t_ref[...], h, preferred_element_type=jnp.float32) + b3c_ref[...]
    h = jax.nn.sigmoid(h)                                # (10, tb)

    # Layer 4 -> one lane-dense output row per batch tile.
    out = jnp.dot(w4t_ref[...], h, preferred_element_type=jnp.float32) + b4_ref[...]  # (1, tb)
    o_ref[0] = out.astype(o_ref.dtype)                   # store into (1, 1, tb) block


def _round_up(n, m):
    return ((n + m - 1) // m) * m


def linear_regression_forward(x, params, *, tile_b=8192):
    """x: (B, 13) float32.  params: dict of weights/biases.  Returns (B, 1) float32."""
    B, F = x.shape
    assert F == 13

    # --- trace-time fusion of layers 1+2 and feature-major (transposed) params ------
    w1, b1 = params["w1"], params["b1"]
    w2, b2 = params["w2"], params["b2"]
    w3, b3 = params["w3"], params["b3"]
    w4, b4 = params["w4"], params["b4"]
    w12t = (w1 @ w2).T            # (10, 13)
    b12c = (b1 @ w2 + b2).T       # (10, 1)
    w3t = w3.T                    # (10, 10)
    b3c = b3.T                    # (10, 1)
    w4t = w4.T                    # (1, 10)
    b4c = b4                      # (1, 1)

    # --- batch tile: lane multiple, >=2 grid steps when possible, capped ------------
    tile_b = max(128, min(_round_up(tile_b, 128), 32768))
    tb = min(tile_b, max(128, _round_up(pl.cdiv(B, 2), 128)))
    nt = pl.cdiv(B, tb)
    if B < tb:                    # single tile smaller than the block: tiny pad only
        x = jnp.pad(x, ((0, tb - B), (0, 0)))

    # VMEM footprint: x double-buffer is lane-padded to 128 lanes (tb*512 B / buffer);
    # lane-dense out double-buffer is ~tb*32 B / buffer; params + temporaries ~small.
    vmem_bytes = 2 * (tb * 128 * 4) + 2 * (8 * tb * 4) + (4 << 20)
    vmem_limit = min(max(vmem_bytes, 32 * 1024 * 1024), 56 * 1024 * 1024)

    full = lambda a: pl.BlockSpec(a.shape, lambda i: (0, 0))  # resident small operand

    out = pl.pallas_call(
        mlp_kernel,
        out_shape=jax.ShapeDtypeStruct((nt, 1, tb), jnp.float32),
        grid_spec=pltpu.PrefetchScalarGridSpec(
            num_scalar_prefetch=0,
            grid=(nt,),
            in_specs=[
                pl.BlockSpec((tb, 13), lambda i: (i, 0)),   # x: only streaming operand
                full(w12t), full(b12c),
                full(w3t), full(b3c),
                full(w4t), full(b4c),
            ],
            out_specs=pl.BlockSpec((1, 1, tb), lambda i: (i, 0, 0)),
        ),
        compiler_params=pltpu.CompilerParams(
            dimension_semantics=("parallel",),
            vmem_limit_bytes=vmem_limit,
        ),
    )(x, w12t, b12c, w3t, b3c, w4t, b4c)

    # (nt, 1, tb) -> (nt*tb,) -> keep valid rows -> (B, 1)
    return out.reshape(nt * tb)[:B][:, None]


def init_params(key):
    """Deterministic synthetic parameters matching the PyTorch module's shapes."""
    ks = jax.random.split(key, 8)

    def linear_init(kw, kb, fan_in, fan_out, uniform01=False):
        if uniform01:
            # mirrors torch.nn.init.uniform_(self.linear.weight): U(0, 1)
            w = jax.random.uniform(kw, (fan_in, fan_out), jnp.float32, 0.0, 1.0)
        else:
            bound = 1.0 / jnp.sqrt(fan_in)
            w = jax.random.uniform(kw, (fan_in, fan_out), jnp.float32, -bound, bound)
        bound = 1.0 / jnp.sqrt(fan_in)
        b = jax.random.uniform(kb, (1, fan_out), jnp.float32, -bound, bound)
        return w, b

    w1, b1 = linear_init(ks[0], ks[1], 13, 10, uniform01=True)
    w2, b2 = linear_init(ks[2], ks[3], 10, 10)
    w3, b3 = linear_init(ks[4], ks[5], 10, 10)
    w4, b4 = linear_init(ks[6], ks[7], 10, 1)
    return {"w1": w1, "b1": b1, "w2": w2, "b2": b2,
            "w3": w3, "b3": b3, "w4": w4, "b4": b4}


def reference_forward(x, p):
    # Unfused row-major reference (matches the PyTorch module exactly).
    h = x @ p["w1"] + p["b1"]
    h = h @ p["w2"] + p["b2"]
    h = jnp.maximum(h, 0.0)
    h = h @ p["w3"] + p["b3"]
    h = jax.nn.sigmoid(h)
    return h @ p["w4"] + p["b4"]


if __name__ == "__main__":
    key = jax.random.PRNGKey(0)
    kx, kx2, kp = jax.random.split(key, 3)
    params = init_params(kp)

    # Small-shape check (B=8): single (padded) tile path.
    x_small = jax.random.normal(kx, (8, 13), jnp.float32)
    out_small = jax.block_until_ready(linear_regression_forward(x_small, params))
    ref_small = reference_forward(x_small, params)
    assert out_small.shape == (8, 1)
    assert jnp.allclose(out_small, ref_small, atol=2e-5, rtol=1e-4)

    # Larger check: multi-step grid (2 tiles), partial x edge block (no wrapper pad),
    # lane-dense multi-tile output path.
    x_big = jax.random.normal(kx2, (2000, 13), jnp.float32)
    out_big = jax.block_until_ready(linear_regression_forward(x_big, params))
    ref_big = reference_forward(x_big, params)
    assert out_big.shape == (2000, 1)
    assert jnp.allclose(out_big, ref_big, atol=2e-5, rtol=1e-4)

    print("KERNEL_OK")
</pallas_src>

<mosaic_0001>
module attributes {stable_mosaic.version = 11 : i64} {
  func.func @mlp_kernel(%arg0: i32, %arg1: memref<128x13xf32, #tpu.memory_space<vmem>>, %arg2: memref<10x13xf32, #tpu.memory_space<vmem>>, %arg3: memref<10x1xf32, #tpu.memory_space<vmem>>, %arg4: memref<10x10xf32, #tpu.memory_space<vmem>>, %arg5: memref<10x1xf32, #tpu.memory_space<vmem>>, %arg6: memref<1x10xf32, #tpu.memory_space<vmem>>, %arg7: memref<1x1xf32, #tpu.memory_space<vmem>>, %arg8: memref<1x1x128xf32, #tpu.memory_space<vmem>>) attributes {dimension_semantics = [#tpu.dimension_semantics<parallel>], iteration_bounds = array<i64: 1>, scalar_prefetch = 0 : i64, scratch_operands = 0 : i64, tpu.core_type = #tpu.core_type<tc>, window_params = [{transform_indices = @transform_0, window_bounds = array<i64: 128, 13>}, {pipeline_mode = #tpu.pipeline_mode<synchronous>, transform_indices = @transform_1, window_bounds = array<i64: 10, 13>}, {pipeline_mode = #tpu.pipeline_mode<synchronous>, transform_indices = @transform_2, window_bounds = array<i64: 10, 1>}, {pipeline_mode = #tpu.pipeline_mode<synchronous>, transform_indices = @transform_3, window_bounds = array<i64: 10, 10>}, {pipeline_mode = #tpu.pipeline_mode<synchronous>, transform_indices = @transform_4, window_bounds = array<i64: 10, 1>}, {pipeline_mode = #tpu.pipeline_mode<synchronous>, transform_indices = @transform_5, window_bounds = array<i64: 1, 10>}, {pipeline_mode = #tpu.pipeline_mode<synchronous>, transform_indices = @transform_6, window_bounds = array<i64: 1, 1>}, {transform_indices = @transform_7, window_bounds = array<i64: 1, 1, 128>}]} {
    %c0 = arith.constant 0 : index
    %c0_0 = arith.constant 0 : index
    %0 = vector.load %arg1[%c0, %c0_0] : memref<128x13xf32, #tpu.memory_space<vmem>>, vector<128x13xf32>
    %c0_1 = arith.constant 0 : index
    %c0_2 = arith.constant 0 : index
    %1 = vector.load %arg2[%c0_1, %c0_2] : memref<10x13xf32, #tpu.memory_space<vmem>>, vector<10x13xf32>
    %cst = arith.constant dense<0.000000e+00> : vector<10x128xf32>
    %2 = tpu.matmul %1, %0, %cst {dimension_numbers = #tpu.dot_dimension_numbers<[1], [1], [0], [0], [0, 0, 1, 0], [], []>} : vector<10x13xf32>, vector<128x13xf32>, vector<10x128xf32> -> vector<10x128xf32>
    %c0_3 = arith.constant 0 : index
    %c0_4 = arith.constant 0 : index
    %3 = vector.load %arg3[%c0_3, %c0_4] : memref<10x1xf32, #tpu.memory_space<vmem>>, vector<10x1xf32>
    %4 = vector.broadcast %3 : vector<10x1xf32> to vector<10x128xf32>
    %5 = arith.addf %2, %4 : vector<10x128xf32>
    %cst_5 = arith.constant 0.000000e+00 : f32
    %6 = vector.broadcast %cst_5 : f32 to vector<10x128xf32>
    %7 = arith.maximumf %5, %6 : vector<10x128xf32>
    %c0_6 = arith.constant 0 : index
    %c0_7 = arith.constant 0 : index
    %8 = vector.load %arg4[%c0_6, %c0_7] : memref<10x10xf32, #tpu.memory_space<vmem>>, vector<10x10xf32>
    %cst_8 = arith.constant dense<0.000000e+00> : vector<10x128xf32>
    %9 = tpu.matmul %8, %7, %cst_8 {dimension_numbers = #tpu.dot_dimension_numbers<[1], [0], [0], [1], [0, 0, 1, 1], [], []>} : vector<10x10xf32>, vector<10x128xf32>, vector<10x128xf32> -> vector<10x128xf32>
    %c0_9 = arith.constant 0 : index
    %c0_10 = arith.constant 0 : index
    %10 = vector.load %arg5[%c0_9, %c0_10] : memref<10x1xf32, #tpu.memory_space<vmem>>, vector<10x1xf32>
    %11 = vector.broadcast %10 : vector<10x1xf32> to vector<10x128xf32>
    %12 = arith.addf %9, %11 : vector<10x128xf32>
    %13 = arith.negf %12 : vector<10x128xf32>
    %14 = math.exp %13 : vector<10x128xf32>
    %cst_11 = arith.constant 1.000000e+00 : f32
    %15 = vector.broadcast %cst_11 : f32 to vector<10x128xf32>
    %16 = arith.addf %15, %14 : vector<10x128xf32>
    %17 = arith.divf %15, %16 : vector<10x128xf32>
    %c0_12 = arith.constant 0 : index
    %c0_13 = arith.constant 0 : index
    %18 = vector.load %arg6[%c0_12, %c0_13] : memref<1x10xf32, #tpu.memory_space<vmem>>, vector<1x10xf32>
    %cst_14 = arith.constant dense<0.000000e+00> : vector<1x128xf32>
    %19 = tpu.matmul %18, %17, %cst_14 {dimension_numbers = #tpu.dot_dimension_numbers<[1], [0], [0], [1], [0, 0, 1, 1], [], []>} : vector<1x10xf32>, vector<10x128xf32>, vector<1x128xf32> -> vector<1x128xf32>
    %c0_15 = arith.constant 0 : index
    %c0_16 = arith.constant 0 : index
    %20 = vector.load %arg7[%c0_15, %c0_16] : memref<1x1xf32, #tpu.memory_space<vmem>>, vector<1x1xf32>
    %21 = vector.broadcast %20 : vector<1x1xf32> to vector<1x128xf32>
    %22 = arith.addf %19, %21 : vector<1x128xf32>
    %c0_17 = arith.constant 0 : index
    %c0_18 = arith.constant 0 : index
    %c0_19 = arith.constant 0 : index
    %23 = vector.load %arg8[%c0_17, %c0_18, %c0_19] : memref<1x1x128xf32, #tpu.memory_space<vmem>>, vector<1x1x128xf32>
    %24 = vector.shape_cast %23 : vector<1x1x128xf32> to vector<1x128xf32>
    %25 = vector.shape_cast %22 : vector<1x128xf32> to vector<1x1x128xf32>
    tpu.vector_store %arg8[%c0_17, %c0_18, %c0_19], %25 {strides = array<i32>} : memref<1x1x128xf32, #tpu.memory_space<vmem>>, vector<1x1x128xf32>,
    return
  }
  func.func @transform_0(%arg0: i32) -> (i32, i32) {
    %c0_i32 = arith.constant 0 : i32
    %c0_i32_0 = arith.constant 0 : i32
    return %arg0, %c0_i32 : i32, i32
  }
  func.func @transform_1(%arg0: i32) -> (i32, i32) {
    %c0_i32 = arith.constant 0 : i32
    %c0_i32_0 = arith.constant 0 : i32
    %c0_i32_1 = arith.constant 0 : i32
    return %c0_i32, %c0_i32_0 : i32, i32
  }
  func.func @transform_2(%arg0: i32) -> (i32, i32) {
    %c0_i32 = arith.constant 0 : i32
    %c0_i32_0 = arith.constant 0 : i32
    %c0_i32_1 = arith.constant 0 : i32
    return %c0_i32, %c0_i32_0 : i32, i32
  }
  func.func @transform_3(%arg0: i32) -> (i32, i32) {
    %c0_i32 = arith.constant 0 : i32
    %c0_i32_0 = arith.constant 0 : i32
    %c0_i32_1 = arith.constant 0 : i32
    return %c0_i32, %c0_i32_0 : i32, i32
  }
  func.func @transform_4(%arg0: i32) -> (i32, i32) {
    %c0_i32 = arith.constant 0 : i32
    %c0_i32_0 = arith.constant 0 : i32
    %c0_i32_1 = arith.constant 0 : i32
    return %c0_i32, %c0_i32_0 : i32, i32
  }
  func.func @transform_5(%arg0: i32) -> (i32, i32) {
    %c0_i32 = arith.constant 0 : i32
    %c0_i32_0 = arith.constant 0 : i32
    %c0_i32_1 = arith.constant 0 : i32
    return %c0_i32, %c0_i32_0 : i32, i32
  }
  func.func @transform_6(%arg0: i32) -> (i32, i32) {
    %c0_i32 = arith.constant 0 : i32
    %c0_i32_0 = arith.constant 0 : i32
    %c0_i32_1 = arith.constant 0 : i32
    return %c0_i32, %c0_i32_0 : i32, i32
  }
  func.func @transform_7(%arg0: i32) -> (i32, i32, i32) {
    %c0_i32 = arith.constant 0 : i32
    %c0_i32_0 = arith.constant 0 : i32
    %c0_i32_1 = arith.constant 0 : i32
    return %arg0, %c0_i32, %c0_i32_0 : i32, i32, i32
  }
}

</mosaic_0001>

<llo_original>
// kernel: tpu_custom_call.1
$region0: #{tpu_custom_call.1}
  #allocation0 [shape = 'u32[]', space=smem, size = 0x4, offset = 0x4, fixed_abs, tag = 'smem constant byte address 0x4 - core index']
  #allocation1 [shape = 'u32[144,128]{1,0:T(1,128)}', space=vmem, size = 0x12000, scoped, tag = 'internal scratch']
  #allocation2 [shape = 'f32[1,1]{1,0:T(1,128)S(1)}', space=vmem, size = 0x200, scoped, tag = 'scoped memory for tpu_custom_call.1']
  %s0 = inlined_call_operand.vmem [shape: f32[128,13], index: 0, kind: input, shape index: {}]
  %s1 = inlined_call_operand.vmem [shape: f32[10,13], index: 1, kind: input, shape index: {}]
  %s2 = inlined_call_operand.vmem [shape: f32[10,1], index: 2, kind: input, shape index: {}]
  %s3 = inlined_call_operand.vmem [shape: f32[10,10], index: 3, kind: input, shape index: {}]
  %s4 = inlined_call_operand.vmem [shape: f32[10,1], index: 4, kind: input, shape index: {}]
  %s5 = inlined_call_operand.vmem [shape: f32[1,10], index: 5, kind: input, shape index: {}]
  %s6 = inlined_call_operand.<no memory space> [shape: f32[1,1], index: 6, kind: input, shape index: {}]
  %s7 = inlined_call_operand.hbm [shape: f32[1,1,128], index: 7, kind: output, shape index: {}]
  %s8 = sld [smem:[#allocation0]]
  $region38: #{tpu_custom_call.1} parent=0
    _
  %s10 = ssub.s32 1, %s8
  %s11 = scalar_select 0, %s10, %s8
  %v12 = vstv %s6
  %13 = vst [vmem:[#allocation2] sm:$0x1] %v12
  $region1: #{tpu_custom_call.1} parent=0
    #allocation3 [shape = 'u8[512]{0}', space=vmem, size = 0x400, scoped, tag = 'output window, operand 0, single buffered']
    #allocation4 [shape = 's32[1]{0}', space=sflag, size = 0x4, scoped, tag = 'scoped memory for tpu_custom_call.1']
    %14 = vsyncpa [#allocation4], 0
    // Predicated region
    $region2: #{tpu_custom_call.1} parent=1 // pred_check
      _
    $region3: #{tpu_custom_call.1} parent=1 // pred_check_branch
      %16 = sbr.rel (0) target = $region5
    $region4: #{tpu_custom_call.1} parent=1 // pred_region
      _
    $region5: #{tpu_custom_call.1} parent=1 // pred_fallthru
      _
    // Predicated region
    $region6: #{tpu_custom_call.1} parent=1 // pred_check
      _
    $region7: #{tpu_custom_call.1} parent=1 // pred_check_branch
      %18 = sbr.rel (0) target = $region9
    $region8: #{tpu_custom_call.1} parent=1 // pred_region
      _
    $region9: #{tpu_custom_call.1} parent=1 // pred_fallthru
      _
    // Predicated region
    $region10: #{tpu_custom_call.1} parent=1 // pred_check
      _
    $region11: #{tpu_custom_call.1} parent=1 // pred_check_branch
      %20 = sbr.rel (0) target = $region13
    $region12: #{tpu_custom_call.1} parent=1 // pred_region
      _
    $region13: #{tpu_custom_call.1} parent=1 // pred_fallthru
      _
    // Predicated region
    $region14: #{tpu_custom_call.1} parent=1 // pred_check
      _
    $region15: #{tpu_custom_call.1} parent=1 // pred_check_branch
      %22 = sbr.rel (0) target = $region17
    $region16: #{tpu_custom_call.1} parent=1 // pred_region
      _
    $region17: #{tpu_custom_call.1} parent=1 // pred_fallthru
      _
    // Predicated region
    $region18: #{tpu_custom_call.1} parent=1 // pred_check
      _
    $region19: #{tpu_custom_call.1} parent=1 // pred_check_branch
      %24 = sbr.rel (0) target = $region21
    $region20: #{tpu_custom_call.1} parent=1 // pred_region
      _
    $region21: #{tpu_custom_call.1} parent=1 // pred_fallthru
      _
    // Predicated region
    $region22: #{tpu_custom_call.1} parent=1 // pred_check
      _
    $region23: #{tpu_custom_call.1} parent=1 // pred_check_branch
      %26 = sbr.rel (0) target = $region25
    $region24: #{tpu_custom_call.1} parent=1 // pred_region
      _
    $region25: #{tpu_custom_call.1} parent=1 // pred_fallthru
      _
    // Predicated region
    $region26: #{tpu_custom_call.1} parent=1 // pred_check
      _
    $region27: #{tpu_custom_call.1} parent=1 // pred_check_branch
      %28 = sbr.rel (0) target = $region29
    $region28: #{tpu_custom_call.1} parent=1 // pred_region
      _
    $region29: #{tpu_custom_call.1} parent=1 // pred_fallthru
      _
    %v29 = vld [vmem:[%s0] sm:$0xff]
    %v30 = vld [vmem:[%s0 + $0x8] sm:$0xff]
    %v31 = vld [vmem:[%s0 + $0x10] sm:$0xff]
    %v32 = vld [vmem:[%s0 + $0x18] sm:$0xff]
    %v33 = vld [vmem:[%s0 + $0x20] sm:$0xff]
    %v34 = vld [vmem:[%s0 + $0x28] sm:$0xff]
    %v35 = vld [vmem:[%s0 + $0x30] sm:$0xff]
    %v36 = vld [vmem:[%s0 + $0x38] sm:$0xff]
    %v37 = vld [vmem:[%s0 + $0x40] sm:$0xff]
    %v38 = vld [vmem:[%s0 + $0x48] sm:$0xff]
    %v39 = vld [vmem:[%s0 + $0x50] sm:$0xff]
    %v40 = vld [vmem:[%s0 + $0x58] sm:$0xff]
    %v41 = vld [vmem:[%s0 + $0x60] sm:$0xff]
    %v42 = vld [vmem:[%s0 + $0x68] sm:$0xff]
    %v43 = vld [vmem:[%s0 + $0x70] sm:$0xff]
    %v44 = vld [vmem:[%s0 + $0x78] sm:$0xff]
    %v45 = vld [vmem:[%s1] sm:$0xff]
    %v46 = vld [vmem:[%s1 + $0x8] sm:$0x3]
    %v47 = vld [vmem:[%s2] sm:$0xff]
    %v48 = vld [vmem:[%s2 + $0x8] sm:$0x3]
    %50 = vset.pattern.permute.xlu0 0
    %51 = vperm.xlu0 %50, %v47
    %v52 = vpop.permute.xlu0 %51
    %55 = vset.pattern.permute.xlu0 0
    %56 = vperm.xlu0 %55, %v48
    %v57 = vpop.permute.xlu0 %56
    %vm59 = vcmask 105472
    %v61 = vsel %vm59, %v45, 0
    %v64 = vsel %vm59, %v46, 0
    %v67 = vsel %vm59, %v29, 0
    %v70 = vsel %vm59, %v30, 0
    %v73 = vsel %vm59, %v31, 0
    %v76 = vsel %vm59, %v32, 0
    %v79 = vsel %vm59, %v33, 0
    %v82 = vsel %vm59, %v34, 0
    %v85 = vsel %vm59, %v35, 0
    %v88 = vsel %vm59, %v36, 0
    %v91 = vsel %vm59, %v37, 0
    %v94 = vsel %vm59, %v38, 0
    %v97 = vsel %vm59, %v39, 0
    %v100 = vsel %vm59, %v40, 0
    %v103 = vsel %vm59, %v41, 0
    %v106 = vsel %vm59, %v42, 0
    %v109 = vsel %vm59, %v43, 0
    %v112 = vsel %vm59, %v44, 0
    %114 = vmatprep.subr.mxu0 0.0
    %115 = vmatpush1.xpose.msra.mxu0 %v67
    %116 = vmatprep.subr.mxu0 0.0
    %117 = vmatpush1.xpose.msra.mxu0 %v70
    %118 = vmatprep.subr.mxu0 0.0
    %119 = vmatpush1.xpose.msra.mxu0 %v73
    %120 = vmatprep.subr.mxu0 0.0
    %121 = vmatpush1.xpose.msra.mxu0 %v76
    %122 = vmatprep.subr.mxu0 0.0
    %123 = vmatpush1.xpose.msra.mxu0 %v79
    %124 = vmatprep.subr.mxu0 0.0
    %125 = vmatpush1.xpose.msra.mxu0 %v82
    %126 = vmatprep.subr.mxu0 0.0
    %127 = vmatpush1.xpose.msra.mxu0 %v85
    %128 = vmatprep.subr.mxu0 0.0
    %129 = vmatpush1.xpose.msra.mxu0 %v88
    %130 = vmatprep.subr.mxu0 0.0
    %131 = vmatpush1.xpose.msra.mxu0 %v91
    %132 = vmatprep.subr.mxu0 0.0
    %133 = vmatpush1.xpose.msra.mxu0 %v94
    %134 = vmatprep.subr.mxu0 0.0
    %135 = vmatpush1.xpose.msra.mxu0 %v97
    %136 = vmatprep.subr.mxu0 0.0
    %137 = vmatpush1.xpose.msra.mxu0 %v100
    %138 = vmatprep.subr.mxu0 0.0
    %139 = vmatpush1.xpose.msra.mxu0 %v103
    %140 = vmatprep.subr.mxu0 0.0
    %141 = vmatpush1.xpose.msra.mxu0 %v106
    %142 = vmatprep.subr.mxu0 0.0
    %143 = vmatpush1.xpose.msra.mxu0 %v109
    %144 = vmatprep.subr.mxu0 0.0
    %145 = vmatpush1.xpose.msra.mxu0 %v112
    %146 = vmatprep.subr.mxu0 0.0
    %147 = vmatpush1.xpose.msra.mxu0 0.0
    %148 = vmatprep.subr.mxu0 0.0
    %149 = vmatpush1.xpose.msra.mxu0 0.0
    %150 = vmatprep.subr.mxu0 0.0
    %151 = vmatpush1.xpose.msra.mxu0 0.0
    %152 = vmatprep.subr.mxu0 0.0
    %153 = vmatpush1.xpose.msra.mxu0 0.0
    %154 = vmatprep.subr.mxu0 0.0
    %155 = vmatpush1.xpose.msra.mxu0 0.0
    %156 = vmatprep.subr.mxu0 0.0
    %157 = vmatpush1.xpose.msra.mxu0 0.0
    %158 = vmatprep.subr.mxu0 0.0
    %159 = vmatpush1.xpose.msra.mxu0 0.0
    %160 = vmatprep.subr.mxu0 0.0
    %161 = vmatpush1.xpose.msra.mxu0 0.0
    %162 = vmatprep.subr.mxu0 0.0
    %163 = vmatpush1.xpose.msra.mxu0 0.0
    %164 = vmatprep.subr.mxu0 0.0
    %165 = vmatpush1.xpose.msra.mxu0 0.0
    %166 = vmatprep.subr.mxu0 0.0
    %167 = vmatpush1.xpose.msra.mxu0 0.0
    %168 = vmatprep.subr.mxu0 0.0
    %169 = vmatpush1.xpose.msra.mxu0 0.0
    %170 = vmatprep.subr.mxu0 0.0
    %171 = vmatpush1.xpose.msra.mxu0 0.0
    %172 = vmatprep.subr.mxu0 0.0
    %173 = vmatpush1.xpose.msra.mxu0 0.0
    %174 = vmatprep.subr.mxu0 0.0
    %175 = vmatpush1.xpose.msra.mxu0 0.0
    %176 = vmatprep.subr.mxu0 0.0
    %177 = vmatpush1.xpose.msra.mxu0 0.0
    %178 = vmatprep.mubr.f32.mxu0 0.0
    %179 = vmatmul.mubr.f32.gmra.mrb[0].mxu0 %v61
    %v180 = vpop.f32.mrb[0].mxu0
    %v181 = vadd.f32 %v52, %v180
    %v182 = vpop.f32.mrb[0].mxu0
    %183 = vmatprep.mubr.f32.mxu0 0.0
    %184 = vmatmul.mubr.f32.gmra.mrb[0].mxu0 %v64
    %v185 = vpop.f32.mrb[0].mxu0
    %v186 = vadd.f32 %v57, %v185
    %v187 = vpop.f32.mrb[0].mxu0
    %188 = vdwg.mxu0
    %v189 = vmax.f32 %v181, 0.0
    %v190 = vmax.f32 %v186, 0.0
    %v191 = vld [vmem:[%s3] sm:$0xff]
    %v192 = vld [vmem:[%s3 + $0x8] sm:$0x3]
    %v193 = vld [vmem:[%s4] sm:$0xff]
    %v194 = vld [vmem:[%s4 + $0x8] sm:$0x3]
    %196 = vset.pattern.permute.xlu0 0
    %197 = vperm.xlu0 %196, %v193
    %v198 = vpop.permute.xlu0 %197
    %201 = vset.pattern.permute.xlu0 0
    %202 = vperm.xlu0 %201, %v194
    %v203 = vpop.permute.xlu0 %202
    %vm205 = vcmask 80896
    %v207 = vsel %vm205, %v191, 0
    %v210 = vsel %vm205, %v192, 0
    %vm212 = vcmask 1041408
    %v214 = vsel %vm212, %v190, 0
    %216 = vmatprep.subr.mxu0 0.0
    %217 = vmatpush1.msra.mxu0 %v189
    %218 = vmatprep.subr.mxu0 0.0
    %219 = vmatpush1.msra.mxu0 %v214
    %220 = vmatprep.subr.mxu0 0.0
    %221 = vmatpush1.msra.mxu0 0.0
    %222 = vmatprep.subr.mxu0 0.0
    %223 = vmatpush1.msra.mxu0 0.0
    %224 = vmatprep.subr.mxu0 0.0
    %225 = vmatpush1.msra.mxu0 0.0
    %226 = vmatprep.subr.mxu0 0.0
    %227 = vmatpush1.msra.mxu0 0.0
    %228 = vmatprep.subr.mxu0 0.0
    %229 = vmatpush1.msra.mxu0 0.0
    %230 = vmatprep.subr.mxu0 0.0
    %231 = vmatpush1.msra.mxu0 0.0
    %232 = vmatprep.subr.mxu0 0.0
    %233 = vmatpush1.msra.mxu0 0.0
    %234 = vmatprep.subr.mxu0 0.0
    %235 = vmatpush1.msra.mxu0 0.0
    %236 = vmatprep.subr.mxu0 0.0
    %237 = vmatpush1.msra.mxu0 0.0
    %238 = vmatprep.subr.mxu0 0.0
    %239 = vmatpush1.msra.mxu0 0.0
    %240 = vmatprep.subr.mxu0 0.0
    %241 = vmatpush1.msra.mxu0 0.0
    %242 = vmatprep.subr.mxu0 0.0
    %243 = vmatpush1.msra.mxu0 0.0
    %244 = vmatprep.subr.mxu0 0.0
    %245 = vmatpush1.msra.mxu0 0.0
    %246 = vmatprep.subr.mxu0 0.0
    %247 = vmatpush1.msra.mxu0 0.0
    %248 = vmatprep.subr.mxu0 0.0
    %249 = vmatpush1.msra.mxu0 0.0
    %250 = vmatprep.subr.mxu0 0.0
    %251 = vmatpush1.msra.mxu0 0.0
    %252 = vmatprep.subr.mxu0 0.0
    %253 = vmatpush1.msra.mxu0 0.0
    %254 = vmatprep.subr.mxu0 0.0
    %255 = vmatpush1.msra.mxu0 0.0
    %256 = vmatprep.subr.mxu0 0.0
    %257 = vmatpush1.msra.mxu0 0.0
    %258 = vmatprep.subr.mxu0 0.0
    %259 = vmatpush1.msra.mxu0 0.0
    %260 = vmatprep.subr.mxu0 0.0
    %261 = vmatpush1.msra.mxu0 0.0
    %262 = vmatprep.subr.mxu0 0.0
    %263 = vmatpush1.msra.mxu0 0.0
    %264 = vmatprep.subr.mxu0 0.0
    %265 = vmatpush1.msra.mxu0 0.0
    %266 = vmatprep.subr.mxu0 0.0
    %267 = vmatpush1.msra.mxu0 0.0
    %268 = vmatprep.subr.mxu0 0.0
    %269 = vmatpush1.msra.mxu0 0.0
    %270 = vmatprep.subr.mxu0 0.0
    %271 = vmatpush1.msra.mxu0 0.0
    %272 = vmatprep.subr.mxu0 0.0
    %273 = vmatpush1.msra.mxu0 0.0
    %274 = vmatprep.subr.mxu0 0.0
    %275 = vmatpush1.msra.mxu0 0.0
    %276 = vmatprep.subr.mxu0 0.0
    %277 = vmatpush1.msra.mxu0 0.0
    %278 = vmatprep.subr.mxu0 0.0
    %279 = vmatpush1.msra.mxu0 0.0
    %280 = vmatprep.mubr.f32.mxu0 0.0
    %281 = vmatmul.mubr.f32.gmra.mrb[0].mxu0 %v207
    %v282 = vpop.f32.mrb[0].mxu0
    %v283 = vadd.f32 %v198, %v282
    %v284 = vpop.f32.mrb[0].mxu0
    %285 = vmatprep.mubr.f32.mxu0 0.0
    %286 = vmatmul.mubr.f32.gmra.mrb[0].mxu0 %v210
    %v287 = vpop.f32.mrb[0].mxu0
    %v288 = vadd.f32 %v203, %v287
    %v289 = vpop.f32.mrb[0].mxu0
    %290 = vdwg.mxu0
    %v291 = vxor.u32 %v283, 2147483648
    %v292 = vxor.u32 %v288, 2147483648
    %v293 = vmul.f32 %v291, 1.442695
    %v294 = vpow.pop %v293
    %v295 = vmul.f32 %v292, 1.442695
    %v296 = vpow.pop %v295
    %v297 = vadd.f32 %v294, 1.0
    %v298 = vadd.f32 %v296, 1.0
    %v299 = vrcp.pop %v297
    %v300 = vmul.f32 1.0, %v299
    %v301 = vrcp.pop %v298
    %v302 = vmul.f32 1.0, %v301
    %v303 = vld [vmem:[%s5] sm:$0x1]
    %v304 = vld [vmem:[#allocation2] sm:$0x1]
    %306 = vset.pattern.permute.xlu0 0
    %307 = vperm.xlu0 %306, %v304
    %v308 = vpop.permute.xlu0 %307
    %v310 = vlaneseq
    %v311 = vshrl.u32 %v310, 7
    %v312 = vsub.s32 0, %v311
    %v313 = vrot.slane %v308, %v312
    %v315 = vsel %vm205, %v303, 0
    %v318 = vsel %vm212, %v302, 0
    %320 = vmatprep.subr.mxu0 0.0
    %321 = vmatpush1.msra.mxu0 %v300
    %322 = vmatprep.subr.mxu0 0.0
    %323 = vmatpush1.msra.mxu0 %v318
    %324 = vmatprep.subr.mxu0 0.0
    %325 = vmatpush1.msra.mxu0 0.0
    %326 = vmatprep.subr.mxu0 0.0
    %327 = vmatpush1.msra.mxu0 0.0
    %328 = vmatprep.subr.mxu0 0.0
    %329 = vmatpush1.msra.mxu0 0.0
    %330 = vmatprep.subr.mxu0 0.0
    %331 = vmatpush1.msra.mxu0 0.0
    %332 = vmatprep.subr.mxu0 0.0
    %333 = vmatpush1.msra.mxu0 0.0
    %334 = vmatprep.subr.mxu0 0.0
    %335 = vmatpush1.msra.mxu0 0.0
    %336 = vmatprep.subr.mxu0 0.0
    %337 = vmatpush1.msra.mxu0 0.0
    %338 = vmatprep.subr.mxu0 0.0
    %339 = vmatpush1.msra.mxu0 0.0
    %340 = vmatprep.subr.mxu0 0.0
    %341 = vmatpush1.msra.mxu0 0.0
    %342 = vmatprep.subr.mxu0 0.0
    %343 = vmatpush1.msra.mxu0 0.0
    %344 = vmatprep.subr.mxu0 0.0
    %345 = vmatpush1.msra.mxu0 0.0
    %346 = vmatprep.subr.mxu0 0.0
    %347 = vmatpush1.msra.mxu0 0.0
    %348 = vmatprep.subr.mxu0 0.0
    %349 = vmatpush1.msra.mxu0 0.0
    %350 = vmatprep.subr.mxu0 0.0
    %351 = vmatpush1.msra.mxu0 0.0
    %352 = vmatprep.subr.mxu0 0.0
    %353 = vmatpush1.msra.mxu0 0.0
    %354 = vmatprep.subr.mxu0 0.0
    %355 = vmatpush1.msra.mxu0 0.0
    %356 = vmatprep.subr.mxu0 0.0
    %357 = vmatpush1.msra.mxu0 0.0
    %358 = vmatprep.subr.mxu0 0.0
    %359 = vmatpush1.msra.mxu0 0.0
    %360 = vmatprep.subr.mxu0 0.0
    %361 = vmatpush1.msra.mxu0 0.0
    %362 = vmatprep.subr.mxu0 0.0
    %363 = vmatpush1.msra.mxu0 0.0
    %364 = vmatprep.subr.mxu0 0.0
    %365 = vmatpush1.msra.mxu0 0.0
    %366 = vmatprep.subr.mxu0 0.0
    %367 = vmatpush1.msra.mxu0 0.0
    %368 = vmatprep.subr.mxu0 0.0
    %369 = vmatpush1.msra.mxu0 0.0
    %370 = vmatprep.subr.mxu0 0.0
    %371 = vmatpush1.msra.mxu0 0.0
    %372 = vmatprep.subr.mxu0 0.0
    %373 = vmatpush1.msra.mxu0 0.0
    %374 = vmatprep.subr.mxu0 0.0
    %375 = vmatpush1.msra.mxu0 0.0
    %376 = vmatprep.subr.mxu0 0.0
    %377 = vmatpush1.msra.mxu0 0.0
    %378 = vmatprep.subr.mxu0 0.0
    %379 = vmatpush1.msra.mxu0 0.0
    %380 = vmatprep.subr.mxu0 0.0
    %381 = vmatpush1.msra.mxu0 0.0
    %382 = vmatprep.subr.mxu0 0.0
    %383 = vmatpush1.msra.mxu0 0.0
    %384 = vmatprep.mubr.f32.mxu0 0.0
    %385 = vmatmul.mubr.f32.gmra.mrb[0].mxu0 %v315
    %v386 = vpop.f32.mrb[0].mxu0
    %v387 = vadd.f32 %v313, %v386
    %v388 = vpop.f32.mrb[0].mxu0
    %389 = vdwg.mxu0
    %390 = vst [vmem:[#allocation3] sm:$0x1] %v387
    // Predicated region
    $region30: #{tpu_custom_call.1} parent=1 // pred_check
      _
    $region31: #{tpu_custom_call.1} parent=1 // pred_check_branch
      %392 = sbr.rel (0) target = $region33
    $region32: #{tpu_custom_call.1} parent=1 // pred_region
      %s394 = ssub.s32 16, 16
      %395 = vsyncadd [#allocation4], %s394
      %s397 = sshll.u32 [#allocation3], 4
      %s398 = int_to_ptr.vmem [resolvable:$true] %s397
      %400 = dma.vmem_to_hbm [thread:$0]  %s398, 16, %s7, [#allocation4]
    $region33: #{tpu_custom_call.1} parent=1 // pred_fallthru
      _
    // Predicated region
    $region34: #{tpu_custom_call.1} parent=1 // pred_check
      _
    $region35: #{tpu_custom_call.1} parent=1 // pred_check_branch
      %402 = sbr.rel (0) target = $region37
    $region36: #{tpu_custom_call.1} parent=1 // pred_region
      %403 = dma.done [#allocation4], 16
    $region37: #{tpu_custom_call.1} parent=1 // pred_fallthru
      _
    %404 = vsyncpa [#allocation4], 1

</llo_original>
